<compile_context>
chip_gen: v7x
topology: tpu7x:2x2x1
jax: 0.10.0
libtpu: 0.0.40
codegen_flags: <defaults>
</compile_context>

<pallas_src>
import functools

import jax
import jax.numpy as jnp
from jax.experimental import pallas as pl
from jax.experimental.pallas import tpu as pltpu


def _round_up(x, m):
    return ((x + m - 1) // m) * m


def _bf16_compute_supported():
    """bf16 VPU/EUP datapaths exist on v6e and newer; not on v2-v5."""
    try:
        kind = jax.devices()[0].device_kind.lower()
    except Exception:
        return False
    if "tpu" not in kind:
        return False
    return not any(t in kind for t in ("v2", "v3", "v4", "v5"))


def fattn_kernel(a_ref, hp_ref, m_ref, wc_ref, o_ref, *, compute_dtype):
    # a_ref : (TB, K, D) native dtype (f32 or bf16)
    # hp_ref: (TB, D)    hprev @ Wh (f32, or bf16 on the bf16-compute path)
    # m_ref : (TB, K)
    # wc_ref: (1, D)     f32
    # o_ref : (TB, K)    f32
    a = a_ref[...]
    hp = hp_ref[...]
    if a.dtype != compute_dtype:
        a = a.astype(compute_dtype)                    # cast AFTER the DMA
    if hp.dtype != compute_dtype:
        hp = hp.astype(compute_dtype)
    # VPU add + EUP tanh; bf16 on v6e/v7x when `a` ships in bf16, else f32.
    e = jnp.tanh(a + hp[:, None, :])                   # (TB, K, D)
    # combined_linear (no bias): multiply + lane reduce over D, accumulated
    # in f32 (bf16 `e` promotes against the f32 wc tile).
    scores = jnp.sum(e * wc_ref[...], axis=-1)         # (TB, K) f32
    # multiplicative mask (exactly torch.mul(alphas, mask)), softmax over K.
    masked = scores * m_ref[...].astype(jnp.float32)   # (TB, K)
    mmax = jnp.max(masked, axis=-1, keepdims=True)     # (TB, 1)
    ex = jnp.exp(masked - mmax)                        # (TB, K)
    denom = jnp.sum(ex, axis=-1, keepdims=True)        # >= exp(0) > 0
    o_ref[...] = (ex * pl.reciprocal(denom, approx=True)).astype(o_ref.dtype)


def fattn_pallas(a, hprev, mask, wh, wc, *, tb_cap=None, bf16_compute=None):
    """Pallas forward of Fattn.  Returns (B, K, 1) f32, like the PyTorch module."""
    B, K, D = a.shape

    if bf16_compute is None:
        bf16_compute = (a.dtype == jnp.bfloat16) and _bf16_compute_supported()
    compute_dtype = jnp.bfloat16 if bf16_compute else jnp.float32

    # hidden_linear hoisted to a single well-shaped XLA matmul (B,H)@(H,D).
    hprev2 = hprev.reshape(B, -1).astype(jnp.float32)
    hprime = (hprev2 @ wh.astype(jnp.float32)).astype(compute_dtype)   # (B, D)
    mask2 = mask.reshape(B, K)                                         # dense 2D, native dtype
    wc2 = wc.reshape(1, D).astype(jnp.float32)

    # Batch tile selection (no padded copy of `a`; the last block may be ragged:
    # OOB input rows are garbage but all reductions are per-row, and OOB output
    # rows are masked out on writeback).
    a_bytes = jnp.dtype(a.dtype).itemsize
    if tb_cap is None:
        tb_cap = 2048 if a_bytes <= 2 else 1024    # ~8 MiB double-buffered `a`
    tb_cap = max(8, (int(tb_cap) // 8) * 8)
    if B <= 8:
        tb = B                                     # full-batch block (legal: equals dim)
    else:
        # aim for >= 2 grid steps so v7x megacore uses both TensorCores
        tb = min(tb_cap, _round_up(pl.cdiv(B, 2), 8))
    grid = (pl.cdiv(B, tb),)

    hp_bytes = jnp.dtype(hprime.dtype).itemsize
    m_bytes = jnp.dtype(mask2.dtype).itemsize
    cost = pl.CostEstimate(
        flops=3 * B * K * D + 6 * B * K,
        transcendentals=B * K * D + B * K + B,     # tanh + exp + reciprocal
        bytes_accessed=int(B * K * D * a_bytes + B * D * hp_bytes
                           + B * K * m_bytes + D * 4 + B * K * 4),
    )

    out2d = pl.pallas_call(
        functools.partial(fattn_kernel, compute_dtype=compute_dtype),
        out_shape=jax.ShapeDtypeStruct((B, K), jnp.float32),
        grid_spec=pltpu.PrefetchScalarGridSpec(
            num_scalar_prefetch=0,
            grid=grid,
            in_specs=[
                pl.BlockSpec((tb, K, D), lambda i: (i, 0, 0)),   # a (native dtype)
                pl.BlockSpec((tb, D), lambda i: (i, 0)),         # hprime, dense 2D
                pl.BlockSpec((tb, K), lambda i: (i, 0)),         # mask, dense 2D
                pl.BlockSpec((1, D), lambda i: (0, 0)),          # Wc (replicated)
            ],
            out_specs=pl.BlockSpec((tb, K), lambda i: (i, 0)),
        ),
        compiler_params=pltpu.CompilerParams(
            dimension_semantics=("parallel",),
            vmem_limit_bytes=32 * 1024 * 1024,     # explicit; safe on v5e/v6e/v7x
        ),
        cost_estimate=cost,
    )(a, hprime, mask2, wc2)

    # restore the PyTorch (B, K, 1) output shape (softmax over dim=1 == K)
    return out2d[:, :, None]


def fattn_reference(a, hprev, mask, wh, wc):
    """Pure-JAX mirror of the PyTorch forward (for verification)."""
    B, K, D = a.shape
    hprev = hprev.reshape(B, -1).astype(jnp.float32)              # torch.squeeze(hprev)
    hprime = hprev @ wh.astype(jnp.float32)                       # hidden_linear (no bias)
    e = jnp.tanh(hprime[:, None, :] + a.astype(jnp.float32))      # tanh(hprime.unsqueeze(1)+a)
    scores = jnp.sum(e * wc.reshape(1, 1, D).astype(jnp.float32),
                     axis=-1, keepdims=True)                      # combined_linear -> (B,K,1)
    masked = scores * mask.reshape(B, K, 1).astype(jnp.float32)   # torch.mul(alphas, mask)
    return jax.nn.softmax(masked, axis=1)                         # softmax over objects


if __name__ == "__main__":
    B, K, H, D = 2, 8, 32, 128   # batch, num objects (K-1), lstm_hidden_dim, obj_feat_dim

    key = jax.random.PRNGKey(0)
    k_a, k_h, k_m, k_wh, k_wc = jax.random.split(key, 5)

    a = jax.random.normal(k_a, (B, K, D), dtype=jnp.float32)
    hprev = jax.random.normal(k_h, (B, H), dtype=jnp.float32)
    mask = (jax.random.uniform(k_m, (B, K)) > 0.3).astype(jnp.float32)

    # nn.Linear-style params, pre-transposed: Wh = hidden_linear.weight.T (H,D),
    # Wc = combined_linear.weight (1,D)
    wh = jax.random.uniform(k_wh, (H, D), minval=-1.0, maxval=1.0) / jnp.sqrt(H)
    wc = jax.random.uniform(k_wc, (1, D), minval=-1.0, maxval=1.0) / jnp.sqrt(D)

    # --- check 1: small batch, f32 inputs, single grid step -----------------
    alphas = jax.block_until_ready(fattn_pallas(a, hprev, mask, wh, wc))
    ref = fattn_reference(a, hprev, mask, wh, wc)
    assert alphas.shape == (B, K, 1)
    err = float(jnp.max(jnp.abs(alphas - ref)))
    assert err < 5e-3, f"max abs err {err}"

    # --- check 2: B % tb != 0 -> ragged last block + multi-step grid --------
    B2 = 20
    k_a2, k_h2, k_m2 = jax.random.split(jax.random.PRNGKey(1), 3)
    a2 = jax.random.normal(k_a2, (B2, K, D), dtype=jnp.float32)
    h2 = jax.random.normal(k_h2, (B2, H), dtype=jnp.float32)
    m2 = (jax.random.uniform(k_m2, (B2, K)) > 0.3).astype(jnp.float32)
    alphas2 = jax.block_until_ready(fattn_pallas(a2, h2, m2, wh, wc, tb_cap=8))
    ref2 = fattn_reference(a2, h2, m2, wh, wc)
    assert alphas2.shape == (B2, K, 1)
    err2 = float(jnp.max(jnp.abs(alphas2 - ref2)))
    assert err2 < 5e-3, f"max abs err {err2}"

    # --- check 3: bf16 activations/mask, default tile selection, ragged -----
    # (bf16 add+tanh on v6e/v7x; bf16 is only a shipping format on v5e)
    a_bf = a2.astype(jnp.bfloat16)
    m_bf = m2.astype(jnp.bfloat16)
    alphas3 = jax.block_until_ready(fattn_pallas(a_bf, h2, m_bf, wh, wc))
    ref3 = fattn_reference(a_bf.astype(jnp.float32), h2,
                           m_bf.astype(jnp.float32), wh, wc)
    err3 = float(jnp.max(jnp.abs(alphas3 - ref3)))
    assert err3 < 3e-2, f"max abs err {err3}"

    print("KERNEL_OK")
</pallas_src>

<mosaic_0001>
module attributes {stable_mosaic.version = 11 : i64} {
  func.func @fattn_kernel(%arg0: i32, %arg1: memref<2x8x128xf32, #tpu.memory_space<vmem>>, %arg2: memref<2x128xf32, #tpu.memory_space<vmem>>, %arg3: memref<2x8xf32, #tpu.memory_space<vmem>>, %arg4: memref<1x128xf32, #tpu.memory_space<vmem>>, %arg5: memref<2x8xf32, #tpu.memory_space<vmem>>) attributes {dimension_semantics = [#tpu.dimension_semantics<parallel>], iteration_bounds = array<i64: 1>, scalar_prefetch = 0 : i64, scratch_operands = 0 : i64, tpu.core_type = #tpu.core_type<tc>, window_params = [{transform_indices = @transform_0, window_bounds = array<i64: 2, 8, 128>}, {transform_indices = @transform_1, window_bounds = array<i64: 2, 128>}, {transform_indices = @transform_2, window_bounds = array<i64: 2, 8>}, {pipeline_mode = #tpu.pipeline_mode<synchronous>, transform_indices = @transform_3, window_bounds = array<i64: 1, 128>}, {transform_indices = @transform_4, window_bounds = array<i64: 2, 8>}]} {
    %c0 = arith.constant 0 : index
    %c0_0 = arith.constant 0 : index
    %c0_1 = arith.constant 0 : index
    %0 = vector.load %arg1[%c0, %c0_0, %c0_1] : memref<2x8x128xf32, #tpu.memory_space<vmem>>, vector<2x8x128xf32>
    %c0_2 = arith.constant 0 : index
    %c0_3 = arith.constant 0 : index
    %1 = vector.load %arg2[%c0_2, %c0_3] : memref<2x128xf32, #tpu.memory_space<vmem>>, vector<2x128xf32>
    %2 = vector.shape_cast %1 : vector<2x128xf32> to vector<2x1x128xf32>
    %3 = vector.broadcast %2 : vector<2x1x128xf32> to vector<2x8x128xf32>
    %4 = arith.addf %0, %3 : vector<2x8x128xf32>
    %5 = math.tanh %4 : vector<2x8x128xf32>
    %c0_4 = arith.constant 0 : index
    %c0_5 = arith.constant 0 : index
    %6 = vector.load %arg4[%c0_4, %c0_5] : memref<1x128xf32, #tpu.memory_space<vmem>>, vector<1x128xf32>
    %7 = vector.shape_cast %6 : vector<1x128xf32> to vector<1x1x128xf32>
    %8 = vector.broadcast %7 : vector<1x1x128xf32> to vector<2x8x128xf32>
    %9 = arith.mulf %5, %8 : vector<2x8x128xf32>
    %cst = arith.constant dense<0.000000e+00> : vector<2x8xf32>
    %10 = vector.multi_reduction <add>, %9, %cst [2] : vector<2x8x128xf32> to vector<2x8xf32>
    %c0_6 = arith.constant 0 : index
    %c0_7 = arith.constant 0 : index
    %11 = vector.load %arg3[%c0_6, %c0_7] : memref<2x8xf32, #tpu.memory_space<vmem>>, vector<2x8xf32>
    %12 = arith.mulf %10, %11 : vector<2x8xf32>
    %cst_8 = arith.constant dense<0xFF800000> : vector<2xf32>
    %13 = vector.multi_reduction <maximumf>, %12, %cst_8 [1] : vector<2x8xf32> to vector<2xf32>
    %14 = vector.shape_cast %13 : vector<2xf32> to vector<2x1xf32>
    %15 = vector.broadcast %14 : vector<2x1xf32> to vector<2x8xf32>
    %16 = arith.subf %12, %15 : vector<2x8xf32>
    %17 = math.exp %16 : vector<2x8xf32>
    %cst_9 = arith.constant dense<0.000000e+00> : vector<2xf32>
    %18 = vector.multi_reduction <add>, %17, %cst_9 [1] : vector<2x8xf32> to vector<2xf32>
    %19 = vector.shape_cast %18 : vector<2xf32> to vector<2x1xf32>
    %20 = tpu.reciprocal %19 {approx = true} : vector<2x1xf32> -> vector<2x1xf32>
    %21 = vector.broadcast %20 : vector<2x1xf32> to vector<2x8xf32>
    %22 = arith.mulf %17, %21 : vector<2x8xf32>
    %c0_10 = arith.constant 0 : index
    %c0_11 = arith.constant 0 : index
    %23 = vector.load %arg5[%c0_10, %c0_11] : memref<2x8xf32, #tpu.memory_space<vmem>>, vector<2x8xf32>
    tpu.vector_store %arg5[%c0_10, %c0_11], %22 {strides = array<i32>} : memref<2x8xf32, #tpu.memory_space<vmem>>, vector<2x8xf32>,
    return
  }
  func.func @transform_0(%arg0: i32) -> (i32, i32, i32) {
    %c0_i32 = arith.constant 0 : i32
    %c0_i32_0 = arith.constant 0 : i32
    %c0_i32_1 = arith.constant 0 : i32
    return %arg0, %c0_i32, %c0_i32_0 : i32, i32, i32
  }
  func.func @transform_1(%arg0: i32) -> (i32, i32) {
    %c0_i32 = arith.constant 0 : i32
    %c0_i32_0 = arith.constant 0 : i32
    return %arg0, %c0_i32 : i32, i32
  }
  func.func @transform_2(%arg0: i32) -> (i32, i32) {
    %c0_i32 = arith.constant 0 : i32
    %c0_i32_0 = arith.constant 0 : i32
    return %arg0, %c0_i32 : i32, i32
  }
  func.func @transform_3(%arg0: i32) -> (i32, i32) {
    %c0_i32 = arith.constant 0 : i32
    %c0_i32_0 = arith.constant 0 : i32
    %c0_i32_1 = arith.constant 0 : i32
    return %c0_i32, %c0_i32_0 : i32, i32
  }
  func.func @transform_4(%arg0: i32) -> (i32, i32) {
    %c0_i32 = arith.constant 0 : i32
    %c0_i32_0 = arith.constant 0 : i32
    return %arg0, %c0_i32 : i32, i32
  }
}

</mosaic_0001>

<llo_original>
// kernel: tpu_custom_call.1
$region0: #{tpu_custom_call.1}
  #allocation0 [shape = 'u32[]', space=smem, size = 0x4, offset = 0x4, fixed_abs, tag = 'smem constant byte address 0x4 - core index']
  #allocation1 [shape = 'u32[144,128]{1,0:T(1,128)}', space=vmem, size = 0x12000, scoped, tag = 'internal scratch']
  %s0 = inlined_call_operand.hbm [shape: f32[2,8,128], index: 0, kind: input, shape index: {}]
  %s1 = inlined_call_operand.vmem [shape: f32[2,128], index: 1, kind: input, shape index: {}]
  %s2 = inlined_call_operand.vmem [shape: f32[2,8], index: 2, kind: input, shape index: {}]
  %s3 = inlined_call_operand.vmem [shape: f32[1,128], index: 3, kind: input, shape index: {}]
  %s4 = inlined_call_operand.hbm [shape: f32[2,8], index: 4, kind: output, shape index: {}]
  %s5 = sld [smem:[#allocation0]]
  $region30: #{tpu_custom_call.1} parent=0
    _
  %s7 = ssub.s32 1, %s5
  %s8 = scalar_select 0, %s7, %s5
  $region1: #{tpu_custom_call.1} parent=0
    #allocation2 [shape = 'u8[8192]{0}', space=vmem, size = 0x2000, scoped, tag = 'input window, operand 0, single buffered']
    #allocation3 [shape = 's32[1]{0}', space=sflag, size = 0x4, scoped, tag = 'scoped memory for tpu_custom_call.1']
    #allocation4 [shape = 's32[1]{0}', space=sflag, size = 0x4, scoped, tag = 'scoped memory for tpu_custom_call.1']
    #allocation5 [shape = 'u8[1024]{0}', space=vmem, size = 0x400, scoped, tag = 'output window, operand 0, single buffered']
    %9 = vsyncpa [#allocation3], 0
    %10 = vsyncpa [#allocation4], 0
    // Predicated region
    $region2: #{tpu_custom_call.1} parent=1 // pred_check
      _
    $region3: #{tpu_custom_call.1} parent=1 // pred_check_branch
      %12 = sbr.rel (0) target = $region5
    $region4: #{tpu_custom_call.1} parent=1 // pred_region
      %s14 = ssub.s32 256, 256
      %15 = vsyncadd [#allocation3], %s14
      %s16 = sshll.u32 [#allocation2], 4
      %s17 = int_to_ptr.vmem [resolvable:$true] %s16
      %22 = dma.hbm_to_vmem [thread:$0]  %s0, 256, %s17, [#allocation3], 128, 128, 8
    $region5: #{tpu_custom_call.1} parent=1 // pred_fallthru
      _
    // Predicated region
    $region6: #{tpu_custom_call.1} parent=1 // pred_check
      _
    $region7: #{tpu_custom_call.1} parent=1 // pred_check_branch
      %24 = sbr.rel (0) target = $region9
    $region8: #{tpu_custom_call.1} parent=1 // pred_region
      _
    $region9: #{tpu_custom_call.1} parent=1 // pred_fallthru
      _
    // Predicated region
    $region10: #{tpu_custom_call.1} parent=1 // pred_check
      _
    $region11: #{tpu_custom_call.1} parent=1 // pred_check_branch
      %26 = sbr.rel (0) target = $region13
    $region12: #{tpu_custom_call.1} parent=1 // pred_region
      _
    $region13: #{tpu_custom_call.1} parent=1 // pred_fallthru
      _
    // Predicated region
    $region14: #{tpu_custom_call.1} parent=1 // pred_check
      _
    $region15: #{tpu_custom_call.1} parent=1 // pred_check_branch
      %28 = sbr.rel (0) target = $region17
    $region16: #{tpu_custom_call.1} parent=1 // pred_region
      _
    $region17: #{tpu_custom_call.1} parent=1 // pred_fallthru
      _
    // Predicated region
    $region18: #{tpu_custom_call.1} parent=1 // pred_check
      _
    $region19: #{tpu_custom_call.1} parent=1 // pred_check_branch
      %30 = sbr.rel (0) target = $region21
    $region20: #{tpu_custom_call.1} parent=1 // pred_region
      %31 = dma.done [#allocation3], 256
    $region21: #{tpu_custom_call.1} parent=1 // pred_fallthru
      _
    %v32 = vld [vmem:[#allocation2] sm:$0xff]
    %v33 = vld [vmem:[#allocation2 + $0x8] sm:$0xff]
    %v34 = vld [vmem:[%s1] sm:$0x3]
    %v37 = vunpack.c.l.s4 1966171168
    %v38 = vunpack.c.0.s8 %v37
    %v39 = vlaneseq
    %v40 = vshrl.u32 %v39, 7
    %v41 = vsub.s32 %v38, %v40
    %v42 = vrot.slane %v34, %v41
    %v43 = vcombine.high %v42, %v42
    %v45 = vunpack.c.l.s4 1966171168
    %v46 = vunpack.c.0.s8 %v45
    %v47 = vlaneseq
    %v48 = vshrl.u32 %v47, 7
    %v49 = vsub.s32 %v46, %v48
    %v50 = vrot.slane %v42, %v49
    %v52 = vunpack.c.l.s4 1966171168
    %v53 = vunpack.c.0.s8 %v52
    %v54 = vlaneseq
    %v55 = vshrl.u32 %v54, 7
    %v56 = vsub.s32 %v53, %v55
    %v57 = vrot.slane %v43, %v56
    %v58 = vlaneseq
    %v59 = vshrl.u32 %v58, 7
    %v60 = vsub.s32 0, %v59
    %v61 = vrot.slane %v50, %v60
    %v62 = vlaneseq
    %v63 = vshrl.u32 %v62, 7
    %v64 = vsub.s32 0, %v63
    %v65 = vrot.slane %v57, %v64
    %v68 = vadd.f32 %v32, %v61
    %v69 = vadd.f32 %v33, %v65
    %v70 = vtanh.pop %v68
    %v71 = vtanh.pop %v69
    %v72 = vld [vmem:[%s3] sm:$0x1]
    %v74 = vlaneseq
    %v75 = vshrl.u32 %v74, 7
    %v76 = vsub.s32 0, %v75
    %v77 = vrot.slane %v72, %v76
    %v79 = vmul.f32 %v70, %v77
    %v80 = vmul.f32 %v71, %v77
    %81 = vadd.xlane.f32.xlu0 %v79
    %v82 = vpop.xlane.xlu0 %81
    %83 = vadd.xlane.f32.xlu0 %v80
    %v84 = vpop.xlane.xlu0 %83
    %v85 = vld [vmem:[%s2] sm:$0x3]
    %v87 = vlaneseq
    %v88 = vshrl.u32 %v87, 7
    %v89 = vsub.s32 0, %v88
    %v90 = vrot.slane %v85, %v89
    %92 = vbcast.lane.b32.xlu0 %v90, 256
    %v93 = vpop.permute.xlu0 %92
    %v94 = vlaneseq
    %v95 = vshrl.u32 %v94, 7
    %v96 = vsub.s32 1, %v95
    %v97 = vrot.slane %v85, %v96
    %99 = vbcast.lane.b32.xlu0 %v97, 256
    %v100 = vpop.permute.xlu0 %99
    %v103 = vmul.f32 %v82, %v93
    %v104 = vmul.f32 %v84, %v100
    %107 = vset.pattern.permute.xlu0 0
    %108 = vperm.xlu0 %107, %v103
    %v109 = vpop.permute.xlu0 %108
    %110 = vset.pattern.permute.xlu0 0
    %111 = vperm.xlu0 %110, %v104
    %v112 = vpop.permute.xlu0 %111
    %v113 = vlaneseq
    %v114 = vand.u32 %v113, 127
    %v115 = vlaneseq
    %v116 = vshrl.u32 %v115, 7
    %v117 = vsub.s32 %v114, %v116
    %v118 = vrot.slane %v109, %v117
    %v119 = vlaneseq
    %v120 = vshrl.u32 %v119, 7
    %v121 = vsub.s32 %v114, %v120
    %v122 = vrot.slane %v112, %v121
    %vm123 = vcmask 1041409
    %v124 = vsel %vm123, %v122, %v118
    %vm126 = vcmask 58368
    %v127 = vsel %vm126, %v124, -inf
    %128 = vmax.xlane.f32.xlu0 %v127
    %v129 = vpop.xlane.xlu0 %128
    %v131 = vlaneseq
    %v132 = vshrl.u32 %v131, 7
    %v133 = vsub.s32 0, %v132
    %v134 = vrot.slane %v129, %v133
    %v135 = vlaneseq
    %v136 = vshrl.u32 %v135, 7
    %v137 = vsub.s32 1, %v136
    %v138 = vrot.slane %v129, %v137
    %v141 = vsub.f32 %v103, %v134
    %v142 = vsub.f32 %v104, %v138
    %v143 = vmul.f32 %v141, 1.442695
    %v144 = vpow.pop %v143
    %v145 = vmul.f32 %v142, 1.442695
    %v146 = vpow.pop %v145
    %149 = vset.pattern.permute.xlu0 0
    %150 = vperm.xlu0 %149, %v144
    %v151 = vpop.permute.xlu0 %150
    %152 = vset.pattern.permute.xlu0 0
    %153 = vperm.xlu0 %152, %v146
    %v154 = vpop.permute.xlu0 %153
    %v155 = vlaneseq
    %v156 = vshrl.u32 %v155, 7
    %v157 = vsub.s32 %v114, %v156
    %v158 = vrot.slane %v151, %v157
    %v159 = vlaneseq
    %v160 = vshrl.u32 %v159, 7
    %v161 = vsub.s32 %v114, %v160
    %v162 = vrot.slane %v154, %v161
    %v163 = vsel %vm123, %v162, %v158
    %v165 = vsel %vm126, %v163, 0.0
    %166 = vadd.xlane.f32.xlu0 %v165
    %v167 = vpop.xlane.xlu0 %166
    %v168 = vrcp.pop %v167
    %v170 = vlaneseq
    %v171 = vshrl.u32 %v170, 7
    %v172 = vsub.s32 0, %v171
    %v173 = vrot.slane %v168, %v172
    %v174 = vlaneseq
    %v175 = vshrl.u32 %v174, 7
    %v176 = vsub.s32 1, %v175
    %v177 = vrot.slane %v168, %v176
    %v180 = vmul.f32 %v144, %v173
    %v181 = vmul.f32 %v146, %v177
    %184 = vset.pattern.permute.xlu0 0
    %185 = vperm.xlu0 %184, %v180
    %v186 = vpop.permute.xlu0 %185
    %187 = vset.pattern.permute.xlu0 0
    %188 = vperm.xlu0 %187, %v181
    %v189 = vpop.permute.xlu0 %188
    %v190 = vlaneseq
    %v191 = vshrl.u32 %v190, 7
    %v192 = vsub.s32 %v114, %v191
    %v193 = vrot.slane %v186, %v192
    %v194 = vlaneseq
    %v195 = vshrl.u32 %v194, 7
    %v196 = vsub.s32 %v114, %v195
    %v197 = vrot.slane %v189, %v196
    %v198 = vsel %vm123, %v197, %v193
    %200 = vst.msk [vmem:[#allocation5] sm:$0x3] %vm126, %v198
    // Predicated region
    $region22: #{tpu_custom_call.1} parent=1 // pred_check
      _
    $region23: #{tpu_custom_call.1} parent=1 // pred_check_branch
      %202 = sbr.rel (0) target = $region25
    $region24: #{tpu_custom_call.1} parent=1 // pred_region
      %s204 = ssub.s32 32, 32
      %205 = vsyncadd [#allocation4], %s204
      %s207 = sshll.u32 [#allocation5], 4
      %s208 = int_to_ptr.vmem [resolvable:$true] %s207
      %210 = dma.vmem_to_hbm [thread:$0]  %s208, 32, %s4, [#allocation4]
    $region25: #{tpu_custom_call.1} parent=1 // pred_fallthru
      _
    // Predicated region
    $region26: #{tpu_custom_call.1} parent=1 // pred_check
      _
    $region27: #{tpu_custom_call.1} parent=1 // pred_check_branch
      %212 = sbr.rel (0) target = $region29
    $region28: #{tpu_custom_call.1} parent=1 // pred_region
      %213 = dma.done [#allocation4], 32
    $region29: #{tpu_custom_call.1} parent=1 // pred_fallthru
      _
    %214 = vsyncpa [#allocation3], 1
    %215 = vsyncpa [#allocation4], 1

</llo_original>
